<compile_context>
chip_gen: v5e
topology: v5e:2x2
jax: 0.10.0
libtpu: 0.0.40
codegen_flags: <defaults>
</compile_context>

<pallas_src>
import jax
import jax.numpy as jnp
from jax.experimental import pallas as pl
from jax.experimental.pallas import tpu as pltpu


def _rnn_cell_kernel(x_ref, w_ref, b_ref, o_ref):
    # bf16 x bf16 -> f32 on the MXU, bias broadcast over rows, ReLU, one store.
    acc = jnp.dot(x_ref[...], w_ref[...], preferred_element_type=jnp.float32)
    o_ref[...] = jnp.maximum(acc + b_ref[...], 0.0).astype(o_ref.dtype)


def _num_h_blocks(hidden_size):
    """v7x has 2 TensorCores/chip: split H across them. v5e/v6e: single shot."""
    if hidden_size % 256 != 0:          # keep lane-dense 128-multiple blocks
        return 1
    try:
        kind = jax.devices()[0].device_kind.lower()
    except Exception:
        return 1
    return 2 if "v7" in kind else 1


def rnn_cell_forward(x, w_ih, bias_ih):
    """relu(x @ w_ih + bias_ih) as a Pallas TPU kernel (bf16 compute, f32 out)."""
    B, K = x.shape
    K2, H = w_ih.shape
    assert K == K2, "x / W_ih inner dims must match"
    assert bias_ih.shape == (H,), "bias_ih must be (hidden_size,)"

    hb = _num_h_blocks(H)
    Hb = H // hb

    # bf16 inputs (halves W DMA, native MXU path); bias/output stay f32.
    x_bf = x.astype(jnp.bfloat16)
    w_bf = w_ih.astype(jnp.bfloat16)
    bias2d = bias_ih.astype(jnp.float32).reshape(1, H)

    # VMEM footprint (inputs double-buffered by the pipeline, output too).
    bytes_x = 2 * B * K
    bytes_w_blk = 2 * K * Hb
    bytes_b_blk = 4 * Hb
    bytes_o_blk = 4 * B * Hb
    footprint = 2 * (bytes_x + bytes_w_blk + bytes_b_blk + bytes_o_blk)
    # Stay under the smallest default scoped VMEM budget (v5e: 16 MiB).
    assert footprint < 16 * 1024 * 1024, (
        "working set too large for the resident kernel; "
        "reintroduce K tiling (accumulate into o_ref) for shapes this big"
    )
    vmem_limit = min(64 << 20, max(4 << 20, 2 * footprint))

    cost = pl.CostEstimate(
        flops=2 * B * K * H,
        transcendentals=0,
        bytes_accessed=2 * (B * K + K * H) + 4 * (H + B * H),
    )

    return pl.pallas_call(
        _rnn_cell_kernel,
        out_shape=jax.ShapeDtypeStruct((B, H), jnp.float32),
        grid=(hb,),
        in_specs=[
            pl.BlockSpec((B, K), lambda j: (0, 0)),    # X: full block, resident
            pl.BlockSpec((K, Hb), lambda j: (0, j)),   # W_ih: H-split (v7x) / full
            pl.BlockSpec((1, Hb), lambda j: (0, j)),   # bias: matching H slice
        ],
        out_specs=pl.BlockSpec((B, Hb), lambda j: (0, j)),
        compiler_params=pltpu.CompilerParams(
            dimension_semantics=("parallel",),
            vmem_limit_bytes=vmem_limit,
        ),
        cost_estimate=cost,
    )(x_bf, w_bf, bias2d)


if __name__ == "__main__":
    # Shapes consistent with the module spec: input_size = hidden_size = 512.
    batch, input_size, hidden_size = 8, 512, 512
    dtype = jnp.float32

    key = jax.random.PRNGKey(0)
    kx, kw, kb = jax.random.split(key, 3)

    # Deterministic params matching init.rand(low=-1, high=1) semantics.
    x = jax.random.uniform(kx, (batch, input_size), dtype, minval=-1.0, maxval=1.0)
    w_ih = jax.random.uniform(kw, (input_size, hidden_size), dtype, minval=-1.0, maxval=1.0)
    bias_ih = jax.random.uniform(kb, (hidden_size,), dtype, minval=-1.0, maxval=1.0)

    out = rnn_cell_forward(x, w_ih, bias_ih)
    out = jax.block_until_ready(out)

    # Reference with the same bf16 input rounding and f32 accumulation.
    x_r = x.astype(jnp.bfloat16).astype(jnp.float32)
    w_r = w_ih.astype(jnp.bfloat16).astype(jnp.float32)
    ref = jnp.maximum(x_r @ w_r + bias_ih, 0.0)

    assert out.shape == (batch, hidden_size)
    assert out.dtype == jnp.float32
    assert jnp.allclose(out, ref, atol=2e-3, rtol=2e-3)

    print("KERNEL_OK")
</pallas_src>

<mosaic_0001>
module attributes {stable_mosaic.version = 11 : i64} {
  func.func @_rnn_cell_kernel(%arg0: i32, %arg1: memref<8x512xbf16, #tpu.memory_space<vmem>>, %arg2: memref<512x512xbf16, #tpu.memory_space<vmem>>, %arg3: memref<1x512xf32, #tpu.memory_space<vmem>>, %arg4: memref<8x512xf32, #tpu.memory_space<vmem>>) attributes {dimension_semantics = [#tpu.dimension_semantics<parallel>], iteration_bounds = array<i64: 1>, scalar_prefetch = 0 : i64, scratch_operands = 0 : i64, tpu.core_type = #tpu.core_type<tc>, window_params = [{pipeline_mode = #tpu.pipeline_mode<synchronous>, transform_indices = @transform_0, window_bounds = array<i64: 8, 512>}, {transform_indices = @transform_1, window_bounds = array<i64: 512, 512>}, {transform_indices = @transform_2, window_bounds = array<i64: 1, 512>}, {transform_indices = @transform_3, window_bounds = array<i64: 8, 512>}]} {
    %c0 = arith.constant 0 : index
    %c0_0 = arith.constant 0 : index
    %0 = vector.load %arg1[%c0, %c0_0] : memref<8x512xbf16, #tpu.memory_space<vmem>>, vector<8x512xbf16>
    %c0_1 = arith.constant 0 : index
    %c0_2 = arith.constant 0 : index
    %1 = vector.load %arg2[%c0_1, %c0_2] : memref<512x512xbf16, #tpu.memory_space<vmem>>, vector<512x512xbf16>
    %cst = arith.constant dense<0.000000e+00> : vector<8x512xf32>
    %2 = tpu.matmul %0, %1, %cst {dimension_numbers = #tpu.dot_dimension_numbers<[1], [0], [0], [1], [0, 0, 1, 1], [], []>} : vector<8x512xbf16>, vector<512x512xbf16>, vector<8x512xf32> -> vector<8x512xf32>
    %c0_3 = arith.constant 0 : index
    %c0_4 = arith.constant 0 : index
    %3 = vector.load %arg3[%c0_3, %c0_4] : memref<1x512xf32, #tpu.memory_space<vmem>>, vector<1x512xf32>
    %4 = vector.broadcast %3 : vector<1x512xf32> to vector<8x512xf32>
    %5 = arith.addf %2, %4 : vector<8x512xf32>
    %cst_5 = arith.constant 0.000000e+00 : f32
    %6 = vector.broadcast %cst_5 : f32 to vector<8x512xf32>
    %7 = arith.maximumf %5, %6 : vector<8x512xf32>
    %c0_6 = arith.constant 0 : index
    %c0_7 = arith.constant 0 : index
    %8 = vector.load %arg4[%c0_6, %c0_7] : memref<8x512xf32, #tpu.memory_space<vmem>>, vector<8x512xf32>
    tpu.vector_store %arg4[%c0_6, %c0_7], %7 {strides = array<i32>} : memref<8x512xf32, #tpu.memory_space<vmem>>, vector<8x512xf32>,
    return
  }
  func.func @transform_0(%arg0: i32) -> (i32, i32) {
    %c0_i32 = arith.constant 0 : i32
    %c0_i32_0 = arith.constant 0 : i32
    %c0_i32_1 = arith.constant 0 : i32
    return %c0_i32, %c0_i32_0 : i32, i32
  }
  func.func @transform_1(%arg0: i32) -> (i32, i32) {
    %c0_i32 = arith.constant 0 : i32
    %c0_i32_0 = arith.constant 0 : i32
    return %c0_i32, %arg0 : i32, i32
  }
  func.func @transform_2(%arg0: i32) -> (i32, i32) {
    %c0_i32 = arith.constant 0 : i32
    %c0_i32_0 = arith.constant 0 : i32
    return %c0_i32, %arg0 : i32, i32
  }
  func.func @transform_3(%arg0: i32) -> (i32, i32) {
    %c0_i32 = arith.constant 0 : i32
    %c0_i32_0 = arith.constant 0 : i32
    return %c0_i32, %arg0 : i32, i32
  }
}

</mosaic_0001>

<llo_original>
// kernel: tpu_custom_call.1
$region0: #{tpu_custom_call.1}
  #allocation0 [shape = 'u32[]', space=smem, size = 0x4, offset = 0x4, fixed_abs, tag = 'smem constant byte address 0x4 - core index']
  #allocation1 [shape = 'u32[72,128]{1,0:T(1,128)}', space=vmem, size = 0x9000, scoped, tag = 'internal scratch']
  %s0 = inlined_call_operand.hbm [shape: bf16[8,512], index: 0, kind: input, shape index: {}]
  %s1 = inlined_call_operand.hbm [shape: bf16[512,512], index: 1, kind: input, shape index: {}]
  %s2 = inlined_call_operand.hbm [shape: f32[1,512], index: 2, kind: input, shape index: {}]
  %s3 = inlined_call_operand.hbm [shape: f32[8,512], index: 3, kind: output, shape index: {}]
  %s4 = sld [smem:[#allocation0]]
  $region34: #{tpu_custom_call.1} parent=0
    _
  %s6 = ssub.s32 1, %s4
  %s7 = scalar_select 0, %s6, %s4
  $region1: #{tpu_custom_call.1} parent=0
    #allocation2 [shape = 'u8[8192]{0}', space=vmem, size = 0x2000, scoped, tag = 'input window, operand 0, single buffered']
    #allocation3 [shape = 's32[1]{0}', space=sflag, size = 0x4, scoped, tag = 'scoped memory for tpu_custom_call.1']
    #allocation4 [shape = 's32[1]{0}', space=sflag, size = 0x4, scoped, tag = 'scoped memory for tpu_custom_call.1']
    #allocation5 [shape = 'u8[524288]{0}', space=vmem, size = 0x80000, scoped, tag = 'input window, operand 1, single buffered']
    #allocation6 [shape = 's32[1]{0}', space=sflag, size = 0x4, scoped, tag = 'scoped memory for tpu_custom_call.1']
    #allocation7 [shape = 'u8[2048]{0}', space=vmem, size = 0x800, scoped, tag = 'input window, operand 2, single buffered']
    #allocation8 [shape = 'u8[16384]{0}', space=vmem, size = 0x4000, scoped, tag = 'output window, operand 0, single buffered']
    %8 = vsyncpa [#allocation3], 0
    %9 = vsyncpa [#allocation6], 0
    %10 = vsyncpa [#allocation4], 0
    // Predicated region
    $region2: #{tpu_custom_call.1} parent=1 // pred_check
      _
    $region3: #{tpu_custom_call.1} parent=1 // pred_check_branch
      %12 = sbr.rel (0) target = $region5
    $region4: #{tpu_custom_call.1} parent=1 // pred_region
      %14 = vsyncadd [#allocation3], 0
      %s16 = sshll.u32 %s0, 4
      %s17 = int_to_ptr.hbm [resolvable:$true] %s16
      %s18 = sshll.u32 [#allocation2], 4
      %s19 = int_to_ptr.vmem [resolvable:$true] %s18
      %21 = dma.hbm_to_vmem [thread:$0]  %s17, 256, %s19, [#allocation3]
    $region5: #{tpu_custom_call.1} parent=1 // pred_fallthru
      _
    // Predicated region
    $region6: #{tpu_custom_call.1} parent=1 // pred_check
      _
    $region7: #{tpu_custom_call.1} parent=1 // pred_check_branch
      %23 = sbr.rel (0) target = $region9
    $region8: #{tpu_custom_call.1} parent=1 // pred_region
      %25 = vsyncadd [#allocation6], 0
      %s26 = sshll.u32 %s1, 4
      %s27 = int_to_ptr.hbm [resolvable:$true] %s26
      %s28 = sshll.u32 [#allocation5], 4
      %s29 = int_to_ptr.vmem [resolvable:$true] %s28
      %34 = dma.hbm_to_vmem [thread:$0]  %s27, 16384, %s29, [#allocation6], 256, 256, 16
    $region9: #{tpu_custom_call.1} parent=1 // pred_fallthru
      _
    // Predicated region
    $region10: #{tpu_custom_call.1} parent=1 // pred_check
      _
    $region11: #{tpu_custom_call.1} parent=1 // pred_check_branch
      %36 = sbr.rel (0) target = $region13
    $region12: #{tpu_custom_call.1} parent=1 // pred_region
      %38 = vsyncadd [#allocation6], 0
      %s40 = sshll.u32 %s2, 4
      %s41 = int_to_ptr.hbm [resolvable:$true] %s40
      %s42 = sshll.u32 [#allocation7], 4
      %s43 = int_to_ptr.vmem [resolvable:$true] %s42
      %45 = dma.hbm_to_vmem [thread:$0]  %s41, 64, %s43, [#allocation6]
    $region13: #{tpu_custom_call.1} parent=1 // pred_fallthru
      _
    // Predicated region
    $region14: #{tpu_custom_call.1} parent=1 // pred_check
      _
    $region15: #{tpu_custom_call.1} parent=1 // pred_check_branch
      %47 = sbr.rel (0) target = $region17
    $region16: #{tpu_custom_call.1} parent=1 // pred_region
      %49 = dma.done [#allocation3], 256
    $region17: #{tpu_custom_call.1} parent=1 // pred_fallthru
      _
    // Predicated region
    $region18: #{tpu_custom_call.1} parent=1 // pred_check
      _
    $region19: #{tpu_custom_call.1} parent=1 // pred_check_branch
      %51 = sbr.rel (0) target = $region21
    $region20: #{tpu_custom_call.1} parent=1 // pred_region
      %53 = dma.done [#allocation6], 16384
    $region21: #{tpu_custom_call.1} parent=1 // pred_fallthru
      _
    // Predicated region
    $region22: #{tpu_custom_call.1} parent=1 // pred_check
      _
    $region23: #{tpu_custom_call.1} parent=1 // pred_check_branch
      %55 = sbr.rel (0) target = $region25
    $region24: #{tpu_custom_call.1} parent=1 // pred_region
      %57 = dma.done [#allocation6], 64
    $region25: #{tpu_custom_call.1} parent=1 // pred_fallthru
      _
    %v58 = vld [vmem:[#allocation2] sm:$0xff]
    %v59 = vld [vmem:[#allocation2 + $0x8] sm:$0xff]
    %v60 = vld [vmem:[#allocation5] sm:$0xff]
    %v61 = vld [vmem:[#allocation5 + $0x8] sm:$0xff]
    %v62 = vld [vmem:[#allocation5 + $0x10] sm:$0xff]
    %v63 = vld [vmem:[#allocation5 + $0x18] sm:$0xff]
    %v64 = vld [vmem:[#allocation5 + $0x20] sm:$0xff]
    %v65 = vld [vmem:[#allocation5 + $0x28] sm:$0xff]
    %v66 = vld [vmem:[#allocation5 + $0x30] sm:$0xff]
    %v67 = vld [vmem:[#allocation5 + $0x38] sm:$0xff]
    %v68 = vld [vmem:[#allocation5 + $0x40] sm:$0xff]
    %v69 = vld [vmem:[#allocation5 + $0x48] sm:$0xff]
    %v70 = vld [vmem:[#allocation5 + $0x50] sm:$0xff]
    %v71 = vld [vmem:[#allocation5 + $0x58] sm:$0xff]
    %v72 = vld [vmem:[#allocation5 + $0x60] sm:$0xff]
    %v73 = vld [vmem:[#allocation5 + $0x68] sm:$0xff]
    %v74 = vld [vmem:[#allocation5 + $0x70] sm:$0xff]
    %v75 = vld [vmem:[#allocation5 + $0x78] sm:$0xff]
    %v76 = vld [vmem:[#allocation5 + $0x80] sm:$0xff]
    %v77 = vld [vmem:[#allocation5 + $0x88] sm:$0xff]
    %v78 = vld [vmem:[#allocation5 + $0x90] sm:$0xff]
    %v79 = vld [vmem:[#allocation5 + $0x98] sm:$0xff]
    %v80 = vld [vmem:[#allocation5 + $0xa0] sm:$0xff]
    %v81 = vld [vmem:[#allocation5 + $0xa8] sm:$0xff]
    %v82 = vld [vmem:[#allocation5 + $0xb0] sm:$0xff]
    %v83 = vld [vmem:[#allocation5 + $0xb8] sm:$0xff]
    %v84 = vld [vmem:[#allocation5 + $0xc0] sm:$0xff]
    %v85 = vld [vmem:[#allocation5 + $0xc8] sm:$0xff]
    %v86 = vld [vmem:[#allocation5 + $0xd0] sm:$0xff]
    %v87 = vld [vmem:[#allocation5 + $0xd8] sm:$0xff]
    %v88 = vld [vmem:[#allocation5 + $0xe0] sm:$0xff]
    %v89 = vld [vmem:[#allocation5 + $0xe8] sm:$0xff]
    %v90 = vld [vmem:[#allocation5 + $0xf0] sm:$0xff]
    %v91 = vld [vmem:[#allocation5 + $0xf8] sm:$0xff]
    %v92 = vld [vmem:[#allocation5 + $0x100] sm:$0xff]
    %v93 = vld [vmem:[#allocation5 + $0x108] sm:$0xff]
    %v94 = vld [vmem:[#allocation5 + $0x110] sm:$0xff]
    %v95 = vld [vmem:[#allocation5 + $0x118] sm:$0xff]
    %v96 = vld [vmem:[#allocation5 + $0x120] sm:$0xff]
    %v97 = vld [vmem:[#allocation5 + $0x128] sm:$0xff]
    %v98 = vld [vmem:[#allocation5 + $0x130] sm:$0xff]
    %v99 = vld [vmem:[#allocation5 + $0x138] sm:$0xff]
    %v100 = vld [vmem:[#allocation5 + $0x140] sm:$0xff]
    %v101 = vld [vmem:[#allocation5 + $0x148] sm:$0xff]
    %v102 = vld [vmem:[#allocation5 + $0x150] sm:$0xff]
    %v103 = vld [vmem:[#allocation5 + $0x158] sm:$0xff]
    %v104 = vld [vmem:[#allocation5 + $0x160] sm:$0xff]
    %v105 = vld [vmem:[#allocation5 + $0x168] sm:$0xff]
    %v106 = vld [vmem:[#allocation5 + $0x170] sm:$0xff]
    %v107 = vld [vmem:[#allocation5 + $0x178] sm:$0xff]
    %v108 = vld [vmem:[#allocation5 + $0x180] sm:$0xff]
    %v109 = vld [vmem:[#allocation5 + $0x188] sm:$0xff]
    %v110 = vld [vmem:[#allocation5 + $0x190] sm:$0xff]
    %v111 = vld [vmem:[#allocation5 + $0x198] sm:$0xff]
    %v112 = vld [vmem:[#allocation5 + $0x1a0] sm:$0xff]
    %v113 = vld [vmem:[#allocation5 + $0x1a8] sm:$0xff]
    %v114 = vld [vmem:[#allocation5 + $0x1b0] sm:$0xff]
    %v115 = vld [vmem:[#allocation5 + $0x1b8] sm:$0xff]
    %v116 = vld [vmem:[#allocation5 + $0x1c0] sm:$0xff]
    %v117 = vld [vmem:[#allocation5 + $0x1c8] sm:$0xff]
    %v118 = vld [vmem:[#allocation5 + $0x1d0] sm:$0xff]
    %v119 = vld [vmem:[#allocation5 + $0x1d8] sm:$0xff]
    %v120 = vld [vmem:[#allocation5 + $0x1e0] sm:$0xff]
    %v121 = vld [vmem:[#allocation5 + $0x1e8] sm:$0xff]
    %v122 = vld [vmem:[#allocation5 + $0x1f0] sm:$0xff]
    %v123 = vld [vmem:[#allocation5 + $0x1f8] sm:$0xff]
    %v124 = vld [vmem:[#allocation5 + $0x200] sm:$0xff]
    %v125 = vld [vmem:[#allocation5 + $0x208] sm:$0xff]
    %v126 = vld [vmem:[#allocation5 + $0x210] sm:$0xff]
    %v127 = vld [vmem:[#allocation5 + $0x218] sm:$0xff]
    %v128 = vld [vmem:[#allocation5 + $0x220] sm:$0xff]
    %v129 = vld [vmem:[#allocation5 + $0x228] sm:$0xff]
    %v130 = vld [vmem:[#allocation5 + $0x230] sm:$0xff]
    %v131 = vld [vmem:[#allocation5 + $0x238] sm:$0xff]
    %v132 = vld [vmem:[#allocation5 + $0x240] sm:$0xff]
    %v133 = vld [vmem:[#allocation5 + $0x248] sm:$0xff]
    %v134 = vld [vmem:[#allocation5 + $0x250] sm:$0xff]
    %v135 = vld [vmem:[#allocation5 + $0x258] sm:$0xff]
    %v136 = vld [vmem:[#allocation5 + $0x260] sm:$0xff]
    %v137 = vld [vmem:[#allocation5 + $0x268] sm:$0xff]
    %v138 = vld [vmem:[#allocation5 + $0x270] sm:$0xff]
    %v139 = vld [vmem:[#allocation5 + $0x278] sm:$0xff]
    %v140 = vld [vmem:[#allocation5 + $0x280] sm:$0xff]
    %v141 = vld [vmem:[#allocation5 + $0x288] sm:$0xff]
    %v142 = vld [vmem:[#allocation5 + $0x290] sm:$0xff]
    %v143 = vld [vmem:[#allocation5 + $0x298] sm:$0xff]
    %v144 = vld [vmem:[#allocation5 + $0x2a0] sm:$0xff]
    %v145 = vld [vmem:[#allocation5 + $0x2a8] sm:$0xff]
    %v146 = vld [vmem:[#allocation5 + $0x2b0] sm:$0xff]
    %v147 = vld [vmem:[#allocation5 + $0x2b8] sm:$0xff]
    %v148 = vld [vmem:[#allocation5 + $0x2c0] sm:$0xff]
    %v149 = vld [vmem:[#allocation5 + $0x2c8] sm:$0xff]
    %v150 = vld [vmem:[#allocation5 + $0x2d0] sm:$0xff]
    %v151 = vld [vmem:[#allocation5 + $0x2d8] sm:$0xff]
    %v152 = vld [vmem:[#allocation5 + $0x2e0] sm:$0xff]
    %v153 = vld [vmem:[#allocation5 + $0x2e8] sm:$0xff]
    %v154 = vld [vmem:[#allocation5 + $0x2f0] sm:$0xff]
    %v155 = vld [vmem:[#allocation5 + $0x2f8] sm:$0xff]
    %v156 = vld [vmem:[#allocation5 + $0x300] sm:$0xff]
    %v157 = vld [vmem:[#allocation5 + $0x308] sm:$0xff]
    %v158 = vld [vmem:[#allocation5 + $0x310] sm:$0xff]
    %v159 = vld [vmem:[#allocation5 + $0x318] sm:$0xff]
    %v160 = vld [vmem:[#allocation5 + $0x320] sm:$0xff]
    %v161 = vld [vmem:[#allocation5 + $0x328] sm:$0xff]
    %v162 = vld [vmem:[#allocation5 + $0x330] sm:$0xff]
    %v163 = vld [vmem:[#allocation5 + $0x338] sm:$0xff]
    %v164 = vld [vmem:[#allocation5 + $0x340] sm:$0xff]
    %v165 = vld [vmem:[#allocation5 + $0x348] sm:$0xff]
    %v166 = vld [vmem:[#allocation5 + $0x350] sm:$0xff]
    %v167 = vld [vmem:[#allocation5 + $0x358] sm:$0xff]
    %v168 = vld [vmem:[#allocation5 + $0x360] sm:$0xff]
    %v169 = vld [vmem:[#allocation5 + $0x368] sm:$0xff]
    %v170 = vld [vmem:[#allocation5 + $0x370] sm:$0xff]
    %v171 = vld [vmem:[#allocation5 + $0x378] sm:$0xff]
    %v172 = vld [vmem:[#allocation5 + $0x380] sm:$0xff]
    %v173 = vld [vmem:[#allocation5 + $0x388] sm:$0xff]
    %v174 = vld [vmem:[#allocation5 + $0x390] sm:$0xff]
    %v175 = vld [vmem:[#allocation5 + $0x398] sm:$0xff]
    %v176 = vld [vmem:[#allocation5 + $0x3a0] sm:$0xff]
    %v177 = vld [vmem:[#allocation5 + $0x3a8] sm:$0xff]
    %v178 = vld [vmem:[#allocation5 + $0x3b0] sm:$0xff]
    %v179 = vld [vmem:[#allocation5 + $0x3b8] sm:$0xff]
    %v180 = vld [vmem:[#allocation5 + $0x3c0] sm:$0xff]
    %v181 = vld [vmem:[#allocation5 + $0x3c8] sm:$0xff]
    %v182 = vld [vmem:[#allocation5 + $0x3d0] sm:$0xff]
    %v183 = vld [vmem:[#allocation5 + $0x3d8] sm:$0xff]
    %v184 = vld [vmem:[#allocation5 + $0x3e0] sm:$0xff]
    %v185 = vld [vmem:[#allocation5 + $0x3e8] sm:$0xff]
    %v186 = vld [vmem:[#allocation5 + $0x3f0] sm:$0xff]
    %v187 = vld [vmem:[#allocation5 + $0x3f8] sm:$0xff]
    %v188 = vld [vmem:[#allocation7] sm:$0xf]
    %v190 = vperm.slane %v188, 0
    %v191 = vperm.slane %v188, 1
    %v192 = vperm.slane %v188, 2
    %v193 = vperm.slane %v188, 3
    %v200 = vunpack.c.l.b16 %v58
    %v201 = vunpack.c.h.b16 %v58
    %v202 = vunpack.c.l.b16 %v59
    %v203 = vunpack.c.h.b16 %v59
    %v204 = vpack.c.b16 %v200, %v200
    %v205 = vpack.c.b16 %v201, %v201
    %v206 = vpack.c.b16 %v202, %v202
    %v207 = vpack.c.b16 %v203, %v203
    %v340 = vunpack.c.l.b16 %v60
    %v341 = vunpack.c.h.b16 %v60
    %v342 = vunpack.c.l.b16 %v61
    %v343 = vunpack.c.h.b16 %v61
    %v344 = vunpack.c.l.b16 %v62
    %v345 = vunpack.c.h.b16 %v62
    %v346 = vunpack.c.l.b16 %v63
    %v347 = vunpack.c.h.b16 %v63
    %v348 = vunpack.c.l.b16 %v64
    %v349 = vunpack.c.h.b16 %v64
    %v350 = vunpack.c.l.b16 %v65
    %v351 = vunpack.c.h.b16 %v65
    %v352 = vunpack.c.l.b16 %v66
    %v353 = vunpack.c.h.b16 %v66
    %v354 = vunpack.c.l.b16 %v67
    %v355 = vunpack.c.h.b16 %v67
    %v356 = vunpack.c.l.b16 %v68
    %v357 = vunpack.c.h.b16 %v68
    %v358 = vunpack.c.l.b16 %v69
    %v359 = vunpack.c.h.b16 %v69
    %v360 = vunpack.c.l.b16 %v70
    %v361 = vunpack.c.h.b16 %v70
    %v362 = vunpack.c.l.b16 %v71
    %v363 = vunpack.c.h.b16 %v71
    %v364 = vunpack.c.l.b16 %v72
    %v365 = vunpack.c.h.b16 %v72
    %v366 = vunpack.c.l.b16 %v73
    %v367 = vunpack.c.h.b16 %v73
    %v368 = vunpack.c.l.b16 %v74
    %v369 = vunpack.c.h.b16 %v74
    %v370 = vunpack.c.l.b16 %v75
    %v371 = vunpack.c.h.b16 %v75
    %v372 = vunpack.c.l.b16 %v76
    %v373 = vunpack.c.h.b16 %v76
    %v374 = vunpack.c.l.b16 %v77
    %v375 = vunpack.c.h.b16 %v77
    %v376 = vunpack.c.l.b16 %v78
    %v377 = vunpack.c.h.b16 %v78
    %v378 = vunpack.c.l.b16 %v79
    %v379 = vunpack.c.h.b16 %v79
    %v380 = vunpack.c.l.b16 %v80
    %v381 = vunpack.c.h.b16 %v80
    %v382 = vunpack.c.l.b16 %v81
    %v383 = vunpack.c.h.b16 %v81
    %v384 = vunpack.c.l.b16 %v82
    %v385 = vunpack.c.h.b16 %v82
    %v386 = vunpack.c.l.b16 %v83
    %v387 = vunpack.c.h.b16 %v83
    %v388 = vunpack.c.l.b16 %v84
    %v389 = vunpack.c.h.b16 %v84
    %v390 = vunpack.c.l.b16 %v85
    %v391 = vunpack.c.h.b16 %v85
    %v392 = vunpack.c.l.b16 %v86
    %v393 = vunpack.c.h.b16 %v86
    %v394 = vunpack.c.l.b16 %v87
    %v395 = vunpack.c.h.b16 %v87
    %v396 = vunpack.c.l.b16 %v88
    %v397 = vunpack.c.h.b16 %v88
    %v398 = vunpack.c.l.b16 %v89
    %v399 = vunpack.c.h.b16 %v89
    %v400 = vunpack.c.l.b16 %v90
    %v401 = vunpack.c.h.b16 %v90
    %v402 = vunpack.c.l.b16 %v91
    %v403 = vunpack.c.h.b16 %v91
    %v404 = vunpack.c.l.b16 %v92
    %v405 = vunpack.c.h.b16 %v92
    %v406 = vunpack.c.l.b16 %v93
    %v407 = vunpack.c.h.b16 %v93
    %v408 = vunpack.c.l.b16 %v94
    %v409 = vunpack.c.h.b16 %v94
    %v410 = vunpack.c.l.b16 %v95
    %v411 = vunpack.c.h.b16 %v95
    %v412 = vunpack.c.l.b16 %v96
    %v413 = vunpack.c.h.b16 %v96
    %v414 = vunpack.c.l.b16 %v97
    %v415 = vunpack.c.h.b16 %v97
    %v416 = vunpack.c.l.b16 %v98
    %v417 = vunpack.c.h.b16 %v98
    %v418 = vunpack.c.l.b16 %v99
    %v419 = vunpack.c.h.b16 %v99
    %v420 = vunpack.c.l.b16 %v100
    %v421 = vunpack.c.h.b16 %v100
    %v422 = vunpack.c.l.b16 %v101
    %v423 = vunpack.c.h.b16 %v101
    %v424 = vunpack.c.l.b16 %v102
    %v425 = vunpack.c.h.b16 %v102
    %v426 = vunpack.c.l.b16 %v103
    %v427 = vunpack.c.h.b16 %v103
    %v428 = vunpack.c.l.b16 %v104
    %v429 = vunpack.c.h.b16 %v104
    %v430 = vunpack.c.l.b16 %v105
    %v431 = vunpack.c.h.b16 %v105
    %v432 = vunpack.c.l.b16 %v106
    %v433 = vunpack.c.h.b16 %v106
    %v434 = vunpack.c.l.b16 %v107
    %v435 = vunpack.c.h.b16 %v107
    %v436 = vunpack.c.l.b16 %v108
    %v437 = vunpack.c.h.b16 %v108
    %v438 = vunpack.c.l.b16 %v109
    %v439 = vunpack.c.h.b16 %v109
    %v440 = vunpack.c.l.b16 %v110
    %v441 = vunpack.c.h.b16 %v110
    %v442 = vunpack.c.l.b16 %v111
    %v443 = vunpack.c.h.b16 %v111
    %v444 = vunpack.c.l.b16 %v112
    %v445 = vunpack.c.h.b16 %v112
    %v446 = vunpack.c.l.b16 %v113
    %v447 = vunpack.c.h.b16 %v113
    %v448 = vunpack.c.l.b16 %v114
    %v449 = vunpack.c.h.b16 %v114
    %v450 = vunpack.c.l.b16 %v115
    %v451 = vunpack.c.h.b16 %v115
    %v452 = vunpack.c.l.b16 %v116
    %v453 = vunpack.c.h.b16 %v116
    %v454 = vunpack.c.l.b16 %v117
    %v455 = vunpack.c.h.b16 %v117
    %v456 = vunpack.c.l.b16 %v118
    %v457 = vunpack.c.h.b16 %v118
    %v458 = vunpack.c.l.b16 %v119
    %v459 = vunpack.c.h.b16 %v119
    %v460 = vunpack.c.l.b16 %v120
    %v461 = vunpack.c.h.b16 %v120
    %v462 = vunpack.c.l.b16 %v121
    %v463 = vunpack.c.h.b16 %v121
    %v464 = vunpack.c.l.b16 %v122
    %v465 = vunpack.c.h.b16 %v122
    %v466 = vunpack.c.l.b16 %v123
    %v467 = vunpack.c.h.b16 %v123
    %v468 = vunpack.c.l.b16 %v124
    %v469 = vunpack.c.h.b16 %v124
    %v470 = vunpack.c.l.b16 %v125
    %v471 = vunpack.c.h.b16 %v125
    %v472 = vunpack.c.l.b16 %v126
    %v473 = vunpack.c.h.b16 %v126
    %v474 = vunpack.c.l.b16 %v127
    %v475 = vunpack.c.h.b16 %v127
    %v476 = vunpack.c.l.b16 %v128
    %v477 = vunpack.c.h.b16 %v128
    %v478 = vunpack.c.l.b16 %v129
    %v479 = vunpack.c.h.b16 %v129
    %v480 = vunpack.c.l.b16 %v130
    %v481 = vunpack.c.h.b16 %v130
    %v482 = vunpack.c.l.b16 %v131
    %v483 = vunpack.c.h.b16 %v131
    %v484 = vunpack.c.l.b16 %v132
    %v485 = vunpack.c.h.b16 %v132
    %v486 = vunpack.c.l.b16 %v133
    %v487 = vunpack.c.h.b16 %v133
    %v488 = vunpack.c.l.b16 %v134
    %v489 = vunpack.c.h.b16 %v134
    %v490 = vunpack.c.l.b16 %v135
    %v491 = vunpack.c.h.b16 %v135
    %v492 = vunpack.c.l.b16 %v136
    %v493 = vunpack.c.h.b16 %v136
    %v494 = vunpack.c.l.b16 %v137
    %v495 = vunpack.c.h.b16 %v137
    %v496 = vunpack.c.l.b16 %v138
    %v497 = vunpack.c.h.b16 %v138
    %v498 = vunpack.c.l.b16 %v139
    %v499 = vunpack.c.h.b16 %v139
    %v500 = vunpack.c.l.b16 %v140
    %v501 = vunpack.c.h.b16 %v140
    %v502 = vunpack.c.l.b16 %v141
    %v503 = vunpack.c.h.b16 %v141
    %v504 = vunpack.c.l.b16 %v142
    %v505 = vunpack.c.h.b16 %v142
    %v506 = vunpack.c.l.b16 %v143
    %v507 = vunpack.c.h.b16 %v143
    %v508 = vunpack.c.l.b16 %v144
    %v509 = vunpack.c.h.b16 %v144
    %v510 = vunpack.c.l.b16 %v145
    %v511 = vunpack.c.h.b16 %v145
    %v512 = vunpack.c.l.b16 %v146
    %v513 = vunpack.c.h.b16 %v146
    %v514 = vunpack.c.l.b16 %v147
    %v515 = vunpack.c.h.b16 %v147
    %v516 = vunpack.c.l.b16 %v148
    %v517 = vunpack.c.h.b16 %v148
    %v518 = vunpack.c.l.b16 %v149
    %v519 = vunpack.c.h.b16 %v149
    %v520 = vunpack.c.l.b16 %v150
    %v521 = vunpack.c.h.b16 %v150
    %v522 = vunpack.c.l.b16 %v151
    %v523 = vunpack.c.h.b16 %v151
    %v524 = vunpack.c.l.b16 %v152
    %v525 = vunpack.c.h.b16 %v152
    %v526 = vunpack.c.l.b16 %v153
    %v527 = vunpack.c.h.b16 %v153
    %v528 = vunpack.c.l.b16 %v154
    %v529 = vunpack.c.h.b16 %v154
    %v530 = vunpack.c.l.b16 %v155
    %v531 = vunpack.c.h.b16 %v155
    %v532 = vunpack.c.l.b16 %v156
    %v533 = vunpack.c.h.b16 %v156
    %v534 = vunpack.c.l.b16 %v157
    %v535 = vunpack.c.h.b16 %v157
    %v536 = vunpack.c.l.b16 %v158
    %v537 = vunpack.c.h.b16 %v158
    %v538 = vunpack.c.l.b16 %v159
    %v539 = vunpack.c.h.b16 %v159
    %v540 = vunpack.c.l.b16 %v160
    %v541 = vunpack.c.h.b16 %v160
    %v542 = vunpack.c.l.b16 %v161
    %v543 = vunpack.c.h.b16 %v161
    %v544 = vunpack.c.l.b16 %v162
    %v545 = vunpack.c.h.b16 %v162
    %v546 = vunpack.c.l.b16 %v163
    %v547 = vunpack.c.h.b16 %v163
    %v548 = vunpack.c.l.b16 %v164
    %v549 = vunpack.c.h.b16 %v164
    %v550 = vunpack.c.l.b16 %v165
    %v551 = vunpack.c.h.b16 %v165
    %v552 = vunpack.c.l.b16 %v166
    %v553 = vunpack.c.h.b16 %v166
    %v554 = vunpack.c.l.b16 %v167
    %v555 = vunpack.c.h.b16 %v167
    %v556 = vunpack.c.l.b16 %v168
    %v557 = vunpack.c.h.b16 %v168
    %v558 = vunpack.c.l.b16 %v169
    %v559 = vunpack.c.h.b16 %v169
    %v560 = vunpack.c.l.b16 %v170
    %v561 = vunpack.c.h.b16 %v170
    %v562 = vunpack.c.l.b16 %v171
    %v563 = vunpack.c.h.b16 %v171
    %v564 = vunpack.c.l.b16 %v172
    %v565 = vunpack.c.h.b16 %v172
    %v566 = vunpack.c.l.b16 %v173
    %v567 = vunpack.c.h.b16 %v173
    %v568 = vunpack.c.l.b16 %v174
    %v569 = vunpack.c.h.b16 %v174
    %v570 = vunpack.c.l.b16 %v175
    %v571 = vunpack.c.h.b16 %v175
    %v572 = vunpack.c.l.b16 %v176
    %v573 = vunpack.c.h.b16 %v176
    %v574 = vunpack.c.l.b16 %v177
    %v575 = vunpack.c.h.b16 %v177
    %v576 = vunpack.c.l.b16 %v178
    %v577 = vunpack.c.h.b16 %v178
    %v578 = vunpack.c.l.b16 %v179
    %v579 = vunpack.c.h.b16 %v179
    %v580 = vunpack.c.l.b16 %v180
    %v581 = vunpack.c.h.b16 %v180
    %v582 = vunpack.c.l.b16 %v181
    %v583 = vunpack.c.h.b16 %v181
    %v584 = vunpack.c.l.b16 %v182
    %v585 = vunpack.c.h.b16 %v182
    %v586 = vunpack.c.l.b16 %v183
    %v587 = vunpack.c.h.b16 %v183
    %v588 = vunpack.c.l.b16 %v184
    %v589 = vunpack.c.h.b16 %v184
    %v590 = vunpack.c.l.b16 %v185
    %v591 = vunpack.c.h.b16 %v185
    %v592 = vunpack.c.l.b16 %v186
    %v593 = vunpack.c.h.b16 %v186
    %v594 = vunpack.c.l.b16 %v187
    %v595 = vunpack.c.h.b16 %v187
    %v596 = vpack.c.b16 %v344, %v340
    %v597 = vpack.c.b16 %v345, %v341
    %v598 = vpack.c.b16 %v346, %v342
    %v599 = vpack.c.b16 %v347, %v343
    %v600 = vpack.c.b16 %v352, %v348
    %v601 = vpack.c.b16 %v353, %v349
    %v602 = vpack.c.b16 %v354, %v350
    %v603 = vpack.c.b16 %v355, %v351
    %v604 = vpack.c.b16 %v360, %v356
    %v605 = vpack.c.b16 %v361, %v357
    %v606 = vpack.c.b16 %v362, %v358
    %v607 = vpack.c.b16 %v363, %v359
    %v608 = vpack.c.b16 %v368, %v364
    %v609 = vpack.c.b16 %v369, %v365
    %v610 = vpack.c.b16 %v370, %v366
    %v611 = vpack.c.b16 %v371, %v367
    %v612 = vpack.c.b16 %v376, %v372
    %v613 = vpack.c.b16 %v377, %v373
    %v614 = vpack.c.b16 %v378, %v374
    %v615 = vpack.c.b16 %v379, %v375
    %v616 = vpack.c.b16 %v384, %v380
    %v617 = vpack.c.b16 %v385, %v381
    %v618 = vpack.c.b16 %v386, %v382
    %v619 = vpack.c.b16 %v387, %v383
    %v620 = vpack.c.b16 %v392, %v388
    %v621 = vpack.c.b16 %v393, %v389
    %v622 = vpack.c.b16 %v394, %v390
    %v623 = vpack.c.b16 %v395, %v391
    %v624 = vpack.c.b16 %v400, %v396
    %v625 = vpack.c.b16 %v401, %v397
    %v626 = vpack.c.b16 %v402, %v398
    %v627 = vpack.c.b16 %v403, %v399
    %v628 = vpack.c.b16 %v408, %v404
    %v629 = vpack.c.b16 %v409, %v405
    %v630 = vpack.c.b16 %v410, %v406
    %v631 = vpack.c.b16 %v411, %v407
    %v632 = vpack.c.b16 %v416, %v412
    %v633 = vpack.c.b16 %v417, %v413
    %v634 = vpack.c.b16 %v418, %v414
    %v635 = vpack.c.b16 %v419, %v415
    %v636 = vpack.c.b16 %v424, %v420
    %v637 = vpack.c.b16 %v425, %v421
    %v638 = vpack.c.b16 %v426, %v422
    %v639 = vpack.c.b16 %v427, %v423
    %v640 = vpack.c.b16 %v432, %v428
    %v641 = vpack.c.b16 %v433, %v429
    %v642 = vpack.c.b16 %v434, %v430
    %v643 = vpack.c.b16 %v435, %v431
    %v644 = vpack.c.b16 %v440, %v436
    %v645 = vpack.c.b16 %v441, %v437
    %v646 = vpack.c.b16 %v442, %v438
    %v647 = vpack.c.b16 %v443, %v439
    %v648 = vpack.c.b16 %v448, %v444
    %v649 = vpack.c.b16 %v449, %v445
    %v650 = vpack.c.b16 %v450, %v446
    %v651 = vpack.c.b16 %v451, %v447
    %v652 = vpack.c.b16 %v456, %v452
    %v653 = vpack.c.b16 %v457, %v453
    %v654 = vpack.c.b16 %v458, %v454
    %v655 = vpack.c.b16 %v459, %v455
    %v656 = vpack.c.b16 %v464, %v460
    %v657 = vpack.c.b16 %v465, %v461
    %v658 = vpack.c.b16 %v466, %v462
    %v659 = vpack.c.b16 %v467, %v463
    %v660 = vpack.c.b16 %v472, %v468
    %v661 = vpack.c.b16 %v473, %v469
    %v662 = vpack.c.b16 %v474, %v470
    %v663 = vpack.c.b16 %v475, %v471
    %v664 = vpack.c.b16 %v480, %v476
    %v665 = vpack.c.b16 %v481, %v477
    %v666 = vpack.c.b16 %v482, %v478
    %v667 = vpack.c.b16 %v483, %v479
    %v668 = vpack.c.b16 %v488, %v484
    %v669 = vpack.c.b16 %v489, %v485
    %v670 = vpack.c.b16 %v490, %v486
    %v671 = vpack.c.b16 %v491, %v487
    %v672 = vpack.c.b16 %v496, %v492
    %v673 = vpack.c.b16 %v497, %v493
    %v674 = vpack.c.b16 %v498, %v494
    %v675 = vpack.c.b16 %v499, %v495
    %v676 = vpack.c.b16 %v504, %v500
    %v677 = vpack.c.b16 %v505, %v501
    %v678 = vpack.c.b16 %v506, %v502
    %v679 = vpack.c.b16 %v507, %v503
    %v680 = vpack.c.b16 %v512, %v508
    %v681 = vpack.c.b16 %v513, %v509
    %v682 = vpack.c.b16 %v514, %v510
    %v683 = vpack.c.b16 %v515, %v511
    %v684 = vpack.c.b16 %v520, %v516
    %v685 = vpack.c.b16 %v521, %v517
    %v686 = vpack.c.b16 %v522, %v518
    %v687 = vpack.c.b16 %v523, %v519
    %v688 = vpack.c.b16 %v528, %v524
    %v689 = vpack.c.b16 %v529, %v525
    %v690 = vpack.c.b16 %v530, %v526
    %v691 = vpack.c.b16 %v531, %v527
    %v692 = vpack.c.b16 %v536, %v532
    %v693 = vpack.c.b16 %v537, %v533
    %v694 = vpack.c.b16 %v538, %v534
    %v695 = vpack.c.b16 %v539, %v535
    %v696 = vpack.c.b16 %v544, %v540
    %v697 = vpack.c.b16 %v545, %v541
    %v698 = vpack.c.b16 %v546, %v542
    %v699 = vpack.c.b16 %v547, %v543
    %v700 = vpack.c.b16 %v552, %v548
    %v701 = vpack.c.b16 %v553, %v549
    %v702 = vpack.c.b16 %v554, %v550
    %v703 = vpack.c.b16 %v555, %v551
    %v704 = vpack.c.b16 %v560, %v556
    %v705 = vpack.c.b16 %v561, %v557
    %v706 = vpack.c.b16 %v562, %v558
    %v707 = vpack.c.b16 %v563, %v559
    %v708 = vpack.c.b16 %v568, %v564
    %v709 = vpack.c.b16 %v569, %v565
    %v710 = vpack.c.b16 %v570, %v566
    %v711 = vpack.c.b16 %v571, %v567
    %v712 = vpack.c.b16 %v576, %v572
    %v713 = vpack.c.b16 %v577, %v573
    %v714 = vpack.c.b16 %v578, %v574
    %v715 = vpack.c.b16 %v579, %v575
    %v716 = vpack.c.b16 %v584, %v580
    %v717 = vpack.c.b16 %v585, %v581
    %v718 = vpack.c.b16 %v586, %v582
    %v719 = vpack.c.b16 %v587, %v583
    %v720 = vpack.c.b16 %v592, %v588
    %v721 = vpack.c.b16 %v593, %v589
    %v722 = vpack.c.b16 %v594, %v590
    %v723 = vpack.c.b16 %v595, %v591
    %852 = vmatpush.bf16.msra.mxu0 %v624
    %853 = vmatpush.bf16.msra.mxu0 %v620
    %854 = vmatpush.bf16.msra.mxu0 %v616
    %855 = vmatpush.bf16.msra.mxu0 %v612
    %856 = vmatpush.bf16.msra.mxu0 %v608
    %857 = vmatpush.bf16.msra.mxu0 %v604
    %858 = vmatpush.bf16.msra.mxu0 %v600
    %859 = vmatpush.bf16.msra.mxu0 %v596
    %860 = vmatmul.bf16.gmra.mxu0 %v204
    %v861 = vpop.f32.mrf.mxu0
    %v862 = vadd.f32 %v190, %v861
    %v863 = vpop.f32.mrf.mxu0
    %864 = vdwg.mxu0
    %865 = vmatpush.bf16.msra.mxu0 %v656
    %866 = vmatpush.bf16.msra.mxu0 %v652
    %867 = vmatpush.bf16.msra.mxu0 %v648
    %868 = vmatpush.bf16.msra.mxu0 %v644
    %869 = vmatpush.bf16.msra.mxu0 %v640
    %870 = vmatpush.bf16.msra.mxu0 %v636
    %871 = vmatpush.bf16.msra.mxu0 %v632
    %872 = vmatpush.bf16.msra.mxu0 %v628
    %873 = vmatmul.bf16.gmra.mxu0 %v205
    %v874 = vpop.f32.mrf.mxu0
    %v875 = vadd.f32 %v862, %v874
    %v876 = vpop.f32.mrf.mxu0
    %877 = vdwg.mxu0
    %878 = vmatpush.bf16.msra.mxu0 %v688
    %879 = vmatpush.bf16.msra.mxu0 %v684
    %880 = vmatpush.bf16.msra.mxu0 %v680
    %881 = vmatpush.bf16.msra.mxu0 %v676
    %882 = vmatpush.bf16.msra.mxu0 %v672
    %883 = vmatpush.bf16.msra.mxu0 %v668
    %884 = vmatpush.bf16.msra.mxu0 %v664
    %885 = vmatpush.bf16.msra.mxu0 %v660
    %886 = vmatmul.bf16.gmra.mxu0 %v206
    %v887 = vpop.f32.mrf.mxu0
    %v888 = vadd.f32 %v875, %v887
    %v889 = vpop.f32.mrf.mxu0
    %890 = vdwg.mxu0
    %891 = vmatpush.bf16.msra.mxu0 %v720
    %892 = vmatpush.bf16.msra.mxu0 %v716
    %893 = vmatpush.bf16.msra.mxu0 %v712
    %894 = vmatpush.bf16.msra.mxu0 %v708
    %895 = vmatpush.bf16.msra.mxu0 %v704
    %896 = vmatpush.bf16.msra.mxu0 %v700
    %897 = vmatpush.bf16.msra.mxu0 %v696
    %898 = vmatpush.bf16.msra.mxu0 %v692
    %899 = vmatmul.bf16.gmra.mxu0 %v207
    %v900 = vpop.f32.mrf.mxu0
    %v901 = vadd.f32 %v888, %v900
    %v902 = vpop.f32.mrf.mxu0
    %903 = vdwg.mxu0
    %904 = vmatpush.bf16.msra.mxu0 %v625
    %905 = vmatpush.bf16.msra.mxu0 %v621
    %906 = vmatpush.bf16.msra.mxu0 %v617
    %907 = vmatpush.bf16.msra.mxu0 %v613
    %908 = vmatpush.bf16.msra.mxu0 %v609
    %909 = vmatpush.bf16.msra.mxu0 %v605
    %910 = vmatpush.bf16.msra.mxu0 %v601
    %911 = vmatpush.bf16.msra.mxu0 %v597
    %912 = vmatmul.bf16.gmra.mxu0 %v204
    %v913 = vpop.f32.mrf.mxu0
    %v914 = vadd.f32 %v191, %v913
    %v915 = vpop.f32.mrf.mxu0
    %916 = vdwg.mxu0
    %917 = vmatpush.bf16.msra.mxu0 %v657
    %918 = vmatpush.bf16.msra.mxu0 %v653
    %919 = vmatpush.bf16.msra.mxu0 %v649
    %920 = vmatpush.bf16.msra.mxu0 %v645
    %921 = vmatpush.bf16.msra.mxu0 %v641
    %922 = vmatpush.bf16.msra.mxu0 %v637
    %923 = vmatpush.bf16.msra.mxu0 %v633
    %924 = vmatpush.bf16.msra.mxu0 %v629
    %925 = vmatmul.bf16.gmra.mxu0 %v205
    %v926 = vpop.f32.mrf.mxu0
    %v927 = vadd.f32 %v914, %v926
    %v928 = vpop.f32.mrf.mxu0
    %929 = vdwg.mxu0
    %930 = vmatpush.bf16.msra.mxu0 %v689
    %931 = vmatpush.bf16.msra.mxu0 %v685
    %932 = vmatpush.bf16.msra.mxu0 %v681
    %933 = vmatpush.bf16.msra.mxu0 %v677
    %934 = vmatpush.bf16.msra.mxu0 %v673
    %935 = vmatpush.bf16.msra.mxu0 %v669
    %936 = vmatpush.bf16.msra.mxu0 %v665
    %937 = vmatpush.bf16.msra.mxu0 %v661
    %938 = vmatmul.bf16.gmra.mxu0 %v206
    %v939 = vpop.f32.mrf.mxu0
    %v940 = vadd.f32 %v927, %v939
    %v941 = vpop.f32.mrf.mxu0
    %942 = vdwg.mxu0
    %943 = vmatpush.bf16.msra.mxu0 %v721
    %944 = vmatpush.bf16.msra.mxu0 %v717
    %945 = vmatpush.bf16.msra.mxu0 %v713
    %946 = vmatpush.bf16.msra.mxu0 %v709
    %947 = vmatpush.bf16.msra.mxu0 %v705
    %948 = vmatpush.bf16.msra.mxu0 %v701
    %949 = vmatpush.bf16.msra.mxu0 %v697
    %950 = vmatpush.bf16.msra.mxu0 %v693
    %951 = vmatmul.bf16.gmra.mxu0 %v207
    %v952 = vpop.f32.mrf.mxu0
    %v953 = vadd.f32 %v940, %v952
    %v954 = vpop.f32.mrf.mxu0
    %955 = vdwg.mxu0
    %956 = vmatpush.bf16.msra.mxu0 %v626
    %957 = vmatpush.bf16.msra.mxu0 %v622
    %958 = vmatpush.bf16.msra.mxu0 %v618
    %959 = vmatpush.bf16.msra.mxu0 %v614
    %960 = vmatpush.bf16.msra.mxu0 %v610
    %961 = vmatpush.bf16.msra.mxu0 %v606
    %962 = vmatpush.bf16.msra.mxu0 %v602
    %963 = vmatpush.bf16.msra.mxu0 %v598
    %964 = vmatmul.bf16.gmra.mxu0 %v204
    %v965 = vpop.f32.mrf.mxu0
    %v966 = vadd.f32 %v192, %v965
    %v967 = vpop.f32.mrf.mxu0
    %968 = vdwg.mxu0
    %969 = vmatpush.bf16.msra.mxu0 %v658
    %970 = vmatpush.bf16.msra.mxu0 %v654
    %971 = vmatpush.bf16.msra.mxu0 %v650
    %972 = vmatpush.bf16.msra.mxu0 %v646
    %973 = vmatpush.bf16.msra.mxu0 %v642
    %974 = vmatpush.bf16.msra.mxu0 %v638
    %975 = vmatpush.bf16.msra.mxu0 %v634
    %976 = vmatpush.bf16.msra.mxu0 %v630
    %977 = vmatmul.bf16.gmra.mxu0 %v205
    %v978 = vpop.f32.mrf.mxu0
    %v979 = vadd.f32 %v966, %v978
    %v980 = vpop.f32.mrf.mxu0
    %981 = vdwg.mxu0
    %982 = vmatpush.bf16.msra.mxu0 %v690
    %983 = vmatpush.bf16.msra.mxu0 %v686
    %984 = vmatpush.bf16.msra.mxu0 %v682
    %985 = vmatpush.bf16.msra.mxu0 %v678
    %986 = vmatpush.bf16.msra.mxu0 %v674
    %987 = vmatpush.bf16.msra.mxu0 %v670
    %988 = vmatpush.bf16.msra.mxu0 %v666
    %989 = vmatpush.bf16.msra.mxu0 %v662
    %990 = vmatmul.bf16.gmra.mxu0 %v206
    %v991 = vpop.f32.mrf.mxu0
    %v992 = vadd.f32 %v979, %v991
    %v993 = vpop.f32.mrf.mxu0
    %994 = vdwg.mxu0
    %995 = vmatpush.bf16.msra.mxu0 %v722
    %996 = vmatpush.bf16.msra.mxu0 %v718
    %997 = vmatpush.bf16.msra.mxu0 %v714
    %998 = vmatpush.bf16.msra.mxu0 %v710
    %999 = vmatpush.bf16.msra.mxu0 %v706
    %1000 = vmatpush.bf16.msra.mxu0 %v702
    %1001 = vmatpush.bf16.msra.mxu0 %v698
    %1002 = vmatpush.bf16.msra.mxu0 %v694
    %1003 = vmatmul.bf16.gmra.mxu0 %v207
    %v1004 = vpop.f32.mrf.mxu0
    %v1005 = vadd.f32 %v992, %v1004
    %v1006 = vpop.f32.mrf.mxu0
    %1007 = vdwg.mxu0
    %1008 = vmatpush.bf16.msra.mxu0 %v627
    %1009 = vmatpush.bf16.msra.mxu0 %v623
    %1010 = vmatpush.bf16.msra.mxu0 %v619
    %1011 = vmatpush.bf16.msra.mxu0 %v615
    %1012 = vmatpush.bf16.msra.mxu0 %v611
    %1013 = vmatpush.bf16.msra.mxu0 %v607
    %1014 = vmatpush.bf16.msra.mxu0 %v603
    %1015 = vmatpush.bf16.msra.mxu0 %v599
    %1016 = vmatmul.bf16.gmra.mxu0 %v204
    %v1017 = vpop.f32.mrf.mxu0
    %v1018 = vadd.f32 %v193, %v1017
    %v1019 = vpop.f32.mrf.mxu0
    %1020 = vdwg.mxu0
    %1021 = vmatpush.bf16.msra.mxu0 %v659
    %1022 = vmatpush.bf16.msra.mxu0 %v655
    %1023 = vmatpush.bf16.msra.mxu0 %v651
    %1024 = vmatpush.bf16.msra.mxu0 %v647
    %1025 = vmatpush.bf16.msra.mxu0 %v643
    %1026 = vmatpush.bf16.msra.mxu0 %v639
    %1027 = vmatpush.bf16.msra.mxu0 %v635
    %1028 = vmatpush.bf16.msra.mxu0 %v631
    %1029 = vmatmul.bf16.gmra.mxu0 %v205
    %v1030 = vpop.f32.mrf.mxu0
    %v1031 = vadd.f32 %v1018, %v1030
    %v1032 = vpop.f32.mrf.mxu0
    %1033 = vdwg.mxu0
    %1034 = vmatpush.bf16.msra.mxu0 %v691
    %1035 = vmatpush.bf16.msra.mxu0 %v687
    %1036 = vmatpush.bf16.msra.mxu0 %v683
    %1037 = vmatpush.bf16.msra.mxu0 %v679
    %1038 = vmatpush.bf16.msra.mxu0 %v675
    %1039 = vmatpush.bf16.msra.mxu0 %v671
    %1040 = vmatpush.bf16.msra.mxu0 %v667
    %1041 = vmatpush.bf16.msra.mxu0 %v663
    %1042 = vmatmul.bf16.gmra.mxu0 %v206
    %v1043 = vpop.f32.mrf.mxu0
    %v1044 = vadd.f32 %v1031, %v1043
    %v1045 = vpop.f32.mrf.mxu0
    %1046 = vdwg.mxu0
    %1047 = vmatpush.bf16.msra.mxu0 %v723
    %1048 = vmatpush.bf16.msra.mxu0 %v719
    %1049 = vmatpush.bf16.msra.mxu0 %v715
    %1050 = vmatpush.bf16.msra.mxu0 %v711
    %1051 = vmatpush.bf16.msra.mxu0 %v707
    %1052 = vmatpush.bf16.msra.mxu0 %v703
    %1053 = vmatpush.bf16.msra.mxu0 %v699
    %1054 = vmatpush.bf16.msra.mxu0 %v695
    %1055 = vmatmul.bf16.gmra.mxu0 %v207
    %v1056 = vpop.f32.mrf.mxu0
    %v1057 = vadd.f32 %v1044, %v1056
    %v1058 = vpop.f32.mrf.mxu0
    %1059 = vdwg.mxu0
    %v1060 = vmax.f32 %v901, 0.0
    %v1061 = vmax.f32 %v953, 0.0
    %v1062 = vmax.f32 %v1005, 0.0
    %v1063 = vmax.f32 %v1057, 0.0
    %1064 = vst [vmem:[#allocation8] sm:$0xff] %v1060
    %1065 = vst [vmem:[#allocation8 + $0x8] sm:$0xff] %v1061
    %1066 = vst [vmem:[#allocation8 + $0x10] sm:$0xff] %v1062
    %1067 = vst [vmem:[#allocation8 + $0x18] sm:$0xff] %v1063
    // Predicated region
    $region26: #{tpu_custom_call.1} parent=1 // pred_check
      _
    $region27: #{tpu_custom_call.1} parent=1 // pred_check_branch
      %1069 = sbr.rel (0) target = $region29
    $region28: #{tpu_custom_call.1} parent=1 // pred_region
      %1071 = vsyncadd [#allocation4], 0
      %s1073 = sshll.u32 [#allocation8], 4
      %s1074 = int_to_ptr.vmem [resolvable:$true] %s1073
      %s1075 = sshll.u32 %s3, 4
      %s1076 = int_to_ptr.hbm [resolvable:$true] %s1075
      %1078 = dma.vmem_to_hbm [thread:$0]  %s1074, 512, %s1076, [#allocation4]
    $region29: #{tpu_custom_call.1} parent=1 // pred_fallthru
      _
    // Predicated region
    $region30: #{tpu_custom_call.1} parent=1 // pred_check
      _
    $region31: #{tpu_custom_call.1} parent=1 // pred_check_branch
      %1080 = sbr.rel (0) target = $region33
    $region32: #{tpu_custom_call.1} parent=1 // pred_region
      %1082 = dma.done [#allocation4], 512
    $region33: #{tpu_custom_call.1} parent=1 // pred_fallthru
      _
    %1083 = vsyncpa [#allocation3], 1
    %1084 = vsyncpa [#allocation6], 1
    %1085 = vsyncpa [#allocation4], 1

</llo_original>
